<compile_context>
chip_gen: v7x
topology: tpu7x:2x2x1
jax: 0.10.0
libtpu: 0.0.40
codegen_flags: <defaults>
</compile_context>

<pallas_src>
import functools
import math

import jax
import jax.numpy as jnp
from jax import lax
from jax.experimental import pallas as pl
from jax.experimental.pallas import tpu as pltpu


@functools.lru_cache(maxsize=1)
def _vmem_limit_bytes():
    """Generation-aware VMEM limit: ~3/4 of physical, clamped to a safe range."""
    try:
        cap = int(pltpu.get_tpu_info().vmem_capacity_bytes)
    except Exception:
        cap = 0
    if cap <= 0:
        return 48 * 1024 * 1024          # safe fallback (fits v7x's 64 MiB)
    return max(32 * 1024 * 1024, min((cap * 3) // 4, 100 * 1024 * 1024))


def _pick_batch_block(b):
    """Batch rows handled per grid step.

    Keep >= 2 grid steps when possible (v7x shares the 'parallel' axis across its
    2 TensorCores) while folding several rows into one step for larger batches so
    the fixed ~0.35us per-step overhead is amortized.
    """
    if b <= 3:
        return 1
    for bt in (8, 4, 2):
        if b % bt == 0 and b // bt >= 2:
            return bt
    return 1


# ------------------------- fused attention core ------------------------------

def _attn_block(q, k, v, w_out, b_out, *, num_heads, out_dtype):
    """All-heads softmax attention + fused output projection for one batch row.

    `q` is already scaled by 1/sqrt(head_dim).  Per-head contexts are concatenated
    into a single lane-dense (Sq, D) tile so the out-projection is one D-deep MXU
    contraction and the HBM store is one dense slab.
    """
    d = q.shape[-1]
    hd = d // num_heads
    ctx = []
    # TODO(synk): for realistic num_heads (8-32) / long Sk switch to a head-batched
    #             dot_general (or a head grid axis) + online-softmax KV loop so the
    #             per-head f32 score temporaries do not all stay live at once.
    for h in range(num_heads):
        lo, hi = h * hd, (h + 1) * hd
        # contract head_dim of both operands directly -> no materialized k.T
        s = lax.dot_general(q[:, lo:hi], k[:, lo:hi],
                            dimension_numbers=(((1,), (1,)), ((), ())),
                            preferred_element_type=jnp.float32)
        m = jnp.max(s, axis=-1, keepdims=True)
        p = jnp.exp(s - m)
        p = p * pl.reciprocal(jnp.sum(p, axis=-1, keepdims=True), approx=True)
        ctx.append(jnp.dot(p, v[:, lo:hi], preferred_element_type=jnp.float32))
    ctx = jnp.concatenate(ctx, axis=-1)                        # (Sq, D) lane-dense
    out = jnp.dot(ctx, w_out, preferred_element_type=jnp.float32) + b_out
    return out.astype(out_dtype)


def _self_mha_kernel(x_ref, w_in_ref, b_in_ref, w_out_ref, b_out_ref, o_ref,
                     *, num_heads, scale):
    """Self-attention: ONE packed (S, D) @ (D, 3D) in-projection per batch row."""
    d = x_ref.shape[-1]
    w_in = w_in_ref[...]                         # (D, 3D), pre-transposed on host
    b_in = b_in_ref[...].astype(jnp.float32)     # (1, 3D)
    w_out = w_out_ref[...]                       # (D, D)
    b_out = b_out_ref[...].astype(jnp.float32)   # (1, D)
    for r in range(x_ref.shape[0]):              # static, small batch-block loop
        qkv = jnp.dot(x_ref[r], w_in, preferred_element_type=jnp.float32) + b_in
        q = qkv[:, :d] * scale                   # fold softmax scale into q
        k = qkv[:, d:2 * d]
        v = qkv[:, 2 * d:]
        o_ref[r] = _attn_block(q, k, v, w_out, b_out,
                               num_heads=num_heads, out_dtype=o_ref.dtype)


def _kvpacked_mha_kernel(xq_ref, xkv_ref, w_in_ref, b_in_ref, w_out_ref, b_out_ref,
                         o_ref, *, num_heads, scale):
    """Cross-attention with key is value: packed (Sk, D) @ (D, 2D) K/V projection."""
    d = xq_ref.shape[-1]
    w_in = w_in_ref[...]
    b_in = b_in_ref[...].astype(jnp.float32)
    w_out = w_out_ref[...]
    b_out = b_out_ref[...].astype(jnp.float32)
    for r in range(xq_ref.shape[0]):
        q = (jnp.dot(xq_ref[r], w_in[:, :d], preferred_element_type=jnp.float32)
             + b_in[:, :d]) * scale
        kv = (jnp.dot(xkv_ref[r], w_in[:, d:], preferred_element_type=jnp.float32)
              + b_in[:, d:])
        k = kv[:, :d]
        v = kv[:, d:]
        o_ref[r] = _attn_block(q, k, v, w_out, b_out,
                               num_heads=num_heads, out_dtype=o_ref.dtype)


def _general_mha_kernel(xq_ref, xk_ref, xv_ref, w_in_ref, b_in_ref, w_out_ref,
                        b_out_ref, o_ref, *, num_heads, scale):
    """Fully general cross-attention: separate q/k/v projections, still one call."""
    d = xq_ref.shape[-1]
    w_in = w_in_ref[...]
    b_in = b_in_ref[...].astype(jnp.float32)
    w_out = w_out_ref[...]
    b_out = b_out_ref[...].astype(jnp.float32)
    for r in range(xq_ref.shape[0]):
        q = (jnp.dot(xq_ref[r], w_in[:, :d], preferred_element_type=jnp.float32)
             + b_in[:, :d]) * scale
        k = (jnp.dot(xk_ref[r], w_in[:, d:2 * d], preferred_element_type=jnp.float32)
             + b_in[:, d:2 * d])
        v = (jnp.dot(xv_ref[r], w_in[:, 2 * d:], preferred_element_type=jnp.float32)
             + b_in[:, 2 * d:])
        o_ref[r] = _attn_block(q, k, v, w_out, b_out,
                               num_heads=num_heads, out_dtype=o_ref.dtype)


_KERNELS = {
    "self": _self_mha_kernel,
    "kv_packed": _kvpacked_mha_kernel,
    "general": _general_mha_kernel,
}


def _fused_mha(inputs, w_in_t, b_in2, w_out_t, b_out2, *, num_heads, mode):
    """One pallas_call running the whole MHA forward, gridded over batch blocks."""
    xq = inputs[0]
    b, sq, d = xq.shape
    bt = _pick_batch_block(b)
    scale = 1.0 / math.sqrt(d // num_heads)

    x_specs = [pl.BlockSpec((bt, sq, d), lambda i: (i, 0, 0))]
    for extra in inputs[1:]:
        x_specs.append(pl.BlockSpec((bt, extra.shape[1], d), lambda i: (i, 0, 0)))

    # Weights/biases: full blocks with a constant index_map -> fetched once and
    # resident in VMEM across all grid steps.
    w_specs = [
        pl.BlockSpec((d, 3 * d), lambda i: (0, 0)),
        pl.BlockSpec((1, 3 * d), lambda i: (0, 0)),
        pl.BlockSpec((d, d), lambda i: (0, 0)),
        pl.BlockSpec((1, d), lambda i: (0, 0)),
    ]

    kernel = functools.partial(_KERNELS[mode], num_heads=num_heads, scale=scale)
    return pl.pallas_call(
        kernel,
        out_shape=jax.ShapeDtypeStruct((b, sq, d), xq.dtype),
        grid=(b // bt,),
        in_specs=x_specs + w_specs,
        out_specs=pl.BlockSpec((bt, sq, d), lambda i: (i, 0, 0)),
        compiler_params=pltpu.CompilerParams(
            dimension_semantics=("parallel",),
            vmem_limit_bytes=_vmem_limit_bytes(),
        ),
    )(*inputs, w_in_t, b_in2, w_out_t, b_out2)


# ----------------------------- module wrapper --------------------------------

def init_mha_params(key, d_model):
    """Deterministic synthetic parameters matching nn.MultiheadAttention shapes."""
    k1, k2, k3, k4 = jax.random.split(key, 4)
    s = 1.0 / math.sqrt(d_model)
    return {
        "in_proj_weight": jax.random.uniform(k1, (3 * d_model, d_model),
                                             jnp.float32, -s, s),
        "in_proj_bias": jax.random.uniform(k2, (3 * d_model,), jnp.float32, -s, s),
        "out_proj_weight": jax.random.uniform(k3, (d_model, d_model),
                                              jnp.float32, -s, s),
        "out_proj_bias": jax.random.uniform(k4, (d_model,), jnp.float32, -s, s),
    }


def multi_head_attention(query, key, value, params, num_heads, mask=None):
    """Equivalent of MultiHeadAttention.forward(query, key, value, mask=None)."""
    if mask is not None:
        # TODO(synk): key_padding_mask not implemented (reference usage passes None).
        raise NotImplementedError("key_padding_mask is not supported")

    d = query.shape[-1]
    w_in_t = params["in_proj_weight"].T              # (D, 3D), transposed once on host
    b_in2 = params["in_proj_bias"].reshape(1, 3 * d)
    w_out_t = params["out_proj_weight"].T            # (D, D)
    b_out2 = params["out_proj_bias"].reshape(1, d)

    # NOTE: object-identity dispatch is a heuristic; a non-self binding simply uses
    # the (correct but slightly slower) packed-KV / general path.
    if (query is key) and (key is value):
        mode, inputs = "self", (query,)
    elif key is value:
        mode, inputs = "kv_packed", (query, key)
    else:
        mode, inputs = "general", (query, key, value)

    return _fused_mha(inputs, w_in_t, b_in2, w_out_t, b_out2,
                      num_heads=num_heads, mode=mode)


def _reference(query, key, value, params, num_heads):
    """Pure-jnp reference for a sanity check."""
    b, sq, d = query.shape
    sk = key.shape[1]
    hd = d // num_heads
    w = params["in_proj_weight"]
    bias = params["in_proj_bias"]
    q = query @ w[0:d].T + bias[0:d]
    k = key @ w[d:2 * d].T + bias[d:2 * d]
    v = value @ w[2 * d:].T + bias[2 * d:]
    q = q.reshape(b, sq, num_heads, hd).transpose(0, 2, 1, 3)
    k = k.reshape(b, sk, num_heads, hd).transpose(0, 2, 1, 3)
    v = v.reshape(b, sk, num_heads, hd).transpose(0, 2, 1, 3)
    s = jnp.einsum("bhqd,bhkd->bhqk", q, k) / math.sqrt(hd)
    p = jax.nn.softmax(s, axis=-1)
    ctx = jnp.einsum("bhqk,bhkd->bhqd", p, v)
    ctx = ctx.transpose(0, 2, 1, 3).reshape(b, sq, d)
    return ctx @ params["out_proj_weight"].T + params["out_proj_bias"]


if __name__ == "__main__":
    d_model, num_heads = 32, 4
    batch, seq = 2, 8

    root = jax.random.PRNGKey(0)
    kp, kx, kk, kv = jax.random.split(root, 4)
    params = init_mha_params(kp, d_model)

    x = jax.random.normal(kx, (batch, seq, d_model), jnp.float32)
    key_in = jax.random.normal(kk, (batch, seq, d_model), jnp.float32)
    val_in = jax.random.normal(kv, (batch, seq, d_model), jnp.float32)

    # Self-attention (fused packed-QKV path).
    out = multi_head_attention(x, x, x, params, num_heads)
    jax.block_until_ready(out)
    ref = _reference(x, x, x, params, num_heads)
    assert out.shape == (batch, seq, d_model)
    # Tolerance accounts for pl.reciprocal(approx=True) in the softmax denominator.
    assert jnp.allclose(out, ref, atol=1e-2, rtol=1e-2), "self-attn mismatch"

    # Cross-attention, distinct key/value (general path).
    out_x = multi_head_attention(x, key_in, val_in, params, num_heads)
    jax.block_until_ready(out_x)
    ref_x = _reference(x, key_in, val_in, params, num_heads)
    assert jnp.allclose(out_x, ref_x, atol=1e-2, rtol=1e-2), "cross-attn mismatch"

    # Cross-attention, key is value (packed K/V projection path).
    out_kv = multi_head_attention(x, key_in, key_in, params, num_heads)
    jax.block_until_ready(out_kv)
    ref_kv = _reference(x, key_in, key_in, params, num_heads)
    assert jnp.allclose(out_kv, ref_kv, atol=1e-2, rtol=1e-2), "kv-packed mismatch"

    print("KERNEL_OK")
</pallas_src>

<mosaic_0001>
module attributes {stable_mosaic.version = 11 : i64} {
  func.func @_self_mha_kernel(%arg0: i32, %arg1: memref<1x8x32xf32, #tpu.memory_space<vmem>>, %arg2: memref<32x96xf32, #tpu.memory_space<vmem>>, %arg3: memref<1x96xf32, #tpu.memory_space<vmem>>, %arg4: memref<32x32xf32, #tpu.memory_space<vmem>>, %arg5: memref<1x32xf32, #tpu.memory_space<vmem>>, %arg6: memref<1x8x32xf32, #tpu.memory_space<vmem>>) attributes {dimension_semantics = [#tpu.dimension_semantics<parallel>], iteration_bounds = array<i64: 2>, scalar_prefetch = 0 : i64, scratch_operands = 0 : i64, tpu.core_type = #tpu.core_type<tc>, window_params = [{transform_indices = @transform_0, window_bounds = array<i64: 1, 8, 32>}, {pipeline_mode = #tpu.pipeline_mode<synchronous>, transform_indices = @transform_1, window_bounds = array<i64: 32, 96>}, {pipeline_mode = #tpu.pipeline_mode<synchronous>, transform_indices = @transform_2, window_bounds = array<i64: 1, 96>}, {pipeline_mode = #tpu.pipeline_mode<synchronous>, transform_indices = @transform_3, window_bounds = array<i64: 32, 32>}, {pipeline_mode = #tpu.pipeline_mode<synchronous>, transform_indices = @transform_4, window_bounds = array<i64: 1, 32>}, {transform_indices = @transform_5, window_bounds = array<i64: 1, 8, 32>}]} {
    %c0 = arith.constant 0 : index
    %c0_0 = arith.constant 0 : index
    %0 = vector.load %arg2[%c0, %c0_0] : memref<32x96xf32, #tpu.memory_space<vmem>>, vector<32x96xf32>
    %c0_1 = arith.constant 0 : index
    %c0_2 = arith.constant 0 : index
    %1 = vector.load %arg3[%c0_1, %c0_2] : memref<1x96xf32, #tpu.memory_space<vmem>>, vector<1x96xf32>
    %c0_3 = arith.constant 0 : index
    %c0_4 = arith.constant 0 : index
    %2 = vector.load %arg4[%c0_3, %c0_4] : memref<32x32xf32, #tpu.memory_space<vmem>>, vector<32x32xf32>
    %c0_5 = arith.constant 0 : index
    %c0_6 = arith.constant 0 : index
    %3 = vector.load %arg5[%c0_5, %c0_6] : memref<1x32xf32, #tpu.memory_space<vmem>>, vector<1x32xf32>
    %c0_7 = arith.constant 0 : index
    %c0_8 = arith.constant 0 : index
    %c0_9 = arith.constant 0 : index
    %4 = vector.load %arg1[%c0_7, %c0_8, %c0_9] : memref<1x8x32xf32, #tpu.memory_space<vmem>>, vector<1x8x32xf32>
    %5 = vector.shape_cast %4 : vector<1x8x32xf32> to vector<8x32xf32>
    %cst = arith.constant dense<0.000000e+00> : vector<8x96xf32>
    %6 = tpu.matmul %5, %0, %cst {dimension_numbers = #tpu.dot_dimension_numbers<[1], [0], [0], [1], [0, 0, 1, 1], [], []>} : vector<8x32xf32>, vector<32x96xf32>, vector<8x96xf32> -> vector<8x96xf32>
    %7 = vector.broadcast %1 : vector<1x96xf32> to vector<8x96xf32>
    %8 = arith.addf %6, %7 : vector<8x96xf32>
    %9 = vector.extract_strided_slice %8 {offsets = [0, 0], sizes = [8, 32], strides = [1, 1]} : vector<8x96xf32> to vector<8x32xf32>
    %cst_10 = arith.constant 0.353553385 : f32
    %10 = vector.broadcast %cst_10 : f32 to vector<8x32xf32>
    %11 = arith.mulf %9, %10 : vector<8x32xf32>
    %12 = vector.extract_strided_slice %8 {offsets = [0, 32], sizes = [8, 32], strides = [1, 1]} : vector<8x96xf32> to vector<8x32xf32>
    %13 = vector.extract_strided_slice %8 {offsets = [0, 64], sizes = [8, 32], strides = [1, 1]} : vector<8x96xf32> to vector<8x32xf32>
    %14 = vector.extract_strided_slice %11 {offsets = [0, 0], sizes = [8, 8], strides = [1, 1]} : vector<8x32xf32> to vector<8x8xf32>
    %15 = vector.extract_strided_slice %12 {offsets = [0, 0], sizes = [8, 8], strides = [1, 1]} : vector<8x32xf32> to vector<8x8xf32>
    %cst_11 = arith.constant dense<0.000000e+00> : vector<8x8xf32>
    %16 = tpu.matmul %14, %15, %cst_11 {dimension_numbers = #tpu.dot_dimension_numbers<[1], [1], [0], [0], [0, 0, 1, 0], [], []>} : vector<8x8xf32>, vector<8x8xf32>, vector<8x8xf32> -> vector<8x8xf32>
    %cst_12 = arith.constant dense<0xFF800000> : vector<8xf32>
    %17 = vector.multi_reduction <maximumf>, %16, %cst_12 [1] : vector<8x8xf32> to vector<8xf32>
    %18 = vector.shape_cast %17 : vector<8xf32> to vector<8x1xf32>
    %19 = vector.broadcast %18 : vector<8x1xf32> to vector<8x8xf32>
    %20 = arith.subf %16, %19 : vector<8x8xf32>
    %21 = math.exp %20 : vector<8x8xf32>
    %cst_13 = arith.constant dense<0.000000e+00> : vector<8xf32>
    %22 = vector.multi_reduction <add>, %21, %cst_13 [1] : vector<8x8xf32> to vector<8xf32>
    %23 = vector.shape_cast %22 : vector<8xf32> to vector<8x1xf32>
    %24 = tpu.reciprocal %23 {approx = true} : vector<8x1xf32> -> vector<8x1xf32>
    %25 = vector.broadcast %24 : vector<8x1xf32> to vector<8x8xf32>
    %26 = arith.mulf %21, %25 : vector<8x8xf32>
    %27 = vector.extract_strided_slice %13 {offsets = [0, 0], sizes = [8, 8], strides = [1, 1]} : vector<8x32xf32> to vector<8x8xf32>
    %cst_14 = arith.constant dense<0.000000e+00> : vector<8x8xf32>
    %28 = tpu.matmul %26, %27, %cst_14 {dimension_numbers = #tpu.dot_dimension_numbers<[1], [0], [0], [1], [0, 0, 1, 1], [], []>} : vector<8x8xf32>, vector<8x8xf32>, vector<8x8xf32> -> vector<8x8xf32>
    %29 = vector.extract_strided_slice %11 {offsets = [0, 8], sizes = [8, 8], strides = [1, 1]} : vector<8x32xf32> to vector<8x8xf32>
    %30 = vector.extract_strided_slice %12 {offsets = [0, 8], sizes = [8, 8], strides = [1, 1]} : vector<8x32xf32> to vector<8x8xf32>
    %cst_15 = arith.constant dense<0.000000e+00> : vector<8x8xf32>
    %31 = tpu.matmul %29, %30, %cst_15 {dimension_numbers = #tpu.dot_dimension_numbers<[1], [1], [0], [0], [0, 0, 1, 0], [], []>} : vector<8x8xf32>, vector<8x8xf32>, vector<8x8xf32> -> vector<8x8xf32>
    %cst_16 = arith.constant dense<0xFF800000> : vector<8xf32>
    %32 = vector.multi_reduction <maximumf>, %31, %cst_16 [1] : vector<8x8xf32> to vector<8xf32>
    %33 = vector.shape_cast %32 : vector<8xf32> to vector<8x1xf32>
    %34 = vector.broadcast %33 : vector<8x1xf32> to vector<8x8xf32>
    %35 = arith.subf %31, %34 : vector<8x8xf32>
    %36 = math.exp %35 : vector<8x8xf32>
    %cst_17 = arith.constant dense<0.000000e+00> : vector<8xf32>
    %37 = vector.multi_reduction <add>, %36, %cst_17 [1] : vector<8x8xf32> to vector<8xf32>
    %38 = vector.shape_cast %37 : vector<8xf32> to vector<8x1xf32>
    %39 = tpu.reciprocal %38 {approx = true} : vector<8x1xf32> -> vector<8x1xf32>
    %40 = vector.broadcast %39 : vector<8x1xf32> to vector<8x8xf32>
    %41 = arith.mulf %36, %40 : vector<8x8xf32>
    %42 = vector.extract_strided_slice %13 {offsets = [0, 8], sizes = [8, 8], strides = [1, 1]} : vector<8x32xf32> to vector<8x8xf32>
    %cst_18 = arith.constant dense<0.000000e+00> : vector<8x8xf32>
    %43 = tpu.matmul %41, %42, %cst_18 {dimension_numbers = #tpu.dot_dimension_numbers<[1], [0], [0], [1], [0, 0, 1, 1], [], []>} : vector<8x8xf32>, vector<8x8xf32>, vector<8x8xf32> -> vector<8x8xf32>
    %44 = vector.extract_strided_slice %11 {offsets = [0, 16], sizes = [8, 8], strides = [1, 1]} : vector<8x32xf32> to vector<8x8xf32>
    %45 = vector.extract_strided_slice %12 {offsets = [0, 16], sizes = [8, 8], strides = [1, 1]} : vector<8x32xf32> to vector<8x8xf32>
    %cst_19 = arith.constant dense<0.000000e+00> : vector<8x8xf32>
    %46 = tpu.matmul %44, %45, %cst_19 {dimension_numbers = #tpu.dot_dimension_numbers<[1], [1], [0], [0], [0, 0, 1, 0], [], []>} : vector<8x8xf32>, vector<8x8xf32>, vector<8x8xf32> -> vector<8x8xf32>
    %cst_20 = arith.constant dense<0xFF800000> : vector<8xf32>
    %47 = vector.multi_reduction <maximumf>, %46, %cst_20 [1] : vector<8x8xf32> to vector<8xf32>
    %48 = vector.shape_cast %47 : vector<8xf32> to vector<8x1xf32>
    %49 = vector.broadcast %48 : vector<8x1xf32> to vector<8x8xf32>
    %50 = arith.subf %46, %49 : vector<8x8xf32>
    %51 = math.exp %50 : vector<8x8xf32>
    %cst_21 = arith.constant dense<0.000000e+00> : vector<8xf32>
    %52 = vector.multi_reduction <add>, %51, %cst_21 [1] : vector<8x8xf32> to vector<8xf32>
    %53 = vector.shape_cast %52 : vector<8xf32> to vector<8x1xf32>
    %54 = tpu.reciprocal %53 {approx = true} : vector<8x1xf32> -> vector<8x1xf32>
    %55 = vector.broadcast %54 : vector<8x1xf32> to vector<8x8xf32>
    %56 = arith.mulf %51, %55 : vector<8x8xf32>
    %57 = vector.extract_strided_slice %13 {offsets = [0, 16], sizes = [8, 8], strides = [1, 1]} : vector<8x32xf32> to vector<8x8xf32>
    %cst_22 = arith.constant dense<0.000000e+00> : vector<8x8xf32>
    %58 = tpu.matmul %56, %57, %cst_22 {dimension_numbers = #tpu.dot_dimension_numbers<[1], [0], [0], [1], [0, 0, 1, 1], [], []>} : vector<8x8xf32>, vector<8x8xf32>, vector<8x8xf32> -> vector<8x8xf32>
    %59 = vector.extract_strided_slice %11 {offsets = [0, 24], sizes = [8, 8], strides = [1, 1]} : vector<8x32xf32> to vector<8x8xf32>
    %60 = vector.extract_strided_slice %12 {offsets = [0, 24], sizes = [8, 8], strides = [1, 1]} : vector<8x32xf32> to vector<8x8xf32>
    %cst_23 = arith.constant dense<0.000000e+00> : vector<8x8xf32>
    %61 = tpu.matmul %59, %60, %cst_23 {dimension_numbers = #tpu.dot_dimension_numbers<[1], [1], [0], [0], [0, 0, 1, 0], [], []>} : vector<8x8xf32>, vector<8x8xf32>, vector<8x8xf32> -> vector<8x8xf32>
    %cst_24 = arith.constant dense<0xFF800000> : vector<8xf32>
    %62 = vector.multi_reduction <maximumf>, %61, %cst_24 [1] : vector<8x8xf32> to vector<8xf32>
    %63 = vector.shape_cast %62 : vector<8xf32> to vector<8x1xf32>
    %64 = vector.broadcast %63 : vector<8x1xf32> to vector<8x8xf32>
    %65 = arith.subf %61, %64 : vector<8x8xf32>
    %66 = math.exp %65 : vector<8x8xf32>
    %cst_25 = arith.constant dense<0.000000e+00> : vector<8xf32>
    %67 = vector.multi_reduction <add>, %66, %cst_25 [1] : vector<8x8xf32> to vector<8xf32>
    %68 = vector.shape_cast %67 : vector<8xf32> to vector<8x1xf32>
    %69 = tpu.reciprocal %68 {approx = true} : vector<8x1xf32> -> vector<8x1xf32>
    %70 = vector.broadcast %69 : vector<8x1xf32> to vector<8x8xf32>
    %71 = arith.mulf %66, %70 : vector<8x8xf32>
    %72 = vector.extract_strided_slice %13 {offsets = [0, 24], sizes = [8, 8], strides = [1, 1]} : vector<8x32xf32> to vector<8x8xf32>
    %cst_26 = arith.constant dense<0.000000e+00> : vector<8x8xf32>
    %73 = tpu.matmul %71, %72, %cst_26 {dimension_numbers = #tpu.dot_dimension_numbers<[1], [0], [0], [1], [0, 0, 1, 1], [], []>} : vector<8x8xf32>, vector<8x8xf32>, vector<8x8xf32> -> vector<8x8xf32>
    %74 = tpu.concatenate %28, %43, %58, %73 in 1 : vector<8x8xf32>, vector<8x8xf32>, vector<8x8xf32>, vector<8x8xf32> -> vector<8x32xf32>
    %cst_27 = arith.constant dense<0.000000e+00> : vector<8x32xf32>
    %75 = tpu.matmul %74, %2, %cst_27 {dimension_numbers = #tpu.dot_dimension_numbers<[1], [0], [0], [1], [0, 0, 1, 1], [], []>} : vector<8x32xf32>, vector<32x32xf32>, vector<8x32xf32> -> vector<8x32xf32>
    %76 = vector.broadcast %3 : vector<1x32xf32> to vector<8x32xf32>
    %77 = arith.addf %75, %76 : vector<8x32xf32>
    %c0_28 = arith.constant 0 : index
    %c0_29 = arith.constant 0 : index
    %c0_30 = arith.constant 0 : index
    %78 = vector.load %arg6[%c0_28, %c0_29, %c0_30] : memref<1x8x32xf32, #tpu.memory_space<vmem>>, vector<1x8x32xf32>
    %79 = vector.shape_cast %78 : vector<1x8x32xf32> to vector<8x32xf32>
    %80 = vector.shape_cast %77 : vector<8x32xf32> to vector<1x8x32xf32>
    tpu.vector_store %arg6[%c0_28, %c0_29, %c0_30], %80 {strides = array<i32>} : memref<1x8x32xf32, #tpu.memory_space<vmem>>, vector<1x8x32xf32>,
    return
  }
  func.func @transform_0(%arg0: i32) -> (i32, i32, i32) {
    %c0_i32 = arith.constant 0 : i32
    %c0_i32_0 = arith.constant 0 : i32
    %c0_i32_1 = arith.constant 0 : i32
    return %arg0, %c0_i32, %c0_i32_0 : i32, i32, i32
  }
  func.func @transform_1(%arg0: i32) -> (i32, i32) {
    %c0_i32 = arith.constant 0 : i32
    %c0_i32_0 = arith.constant 0 : i32
    %c0_i32_1 = arith.constant 0 : i32
    return %c0_i32, %c0_i32_0 : i32, i32
  }
  func.func @transform_2(%arg0: i32) -> (i32, i32) {
    %c0_i32 = arith.constant 0 : i32
    %c0_i32_0 = arith.constant 0 : i32
    %c0_i32_1 = arith.constant 0 : i32
    return %c0_i32, %c0_i32_0 : i32, i32
  }
  func.func @transform_3(%arg0: i32) -> (i32, i32) {
    %c0_i32 = arith.constant 0 : i32
    %c0_i32_0 = arith.constant 0 : i32
    %c0_i32_1 = arith.constant 0 : i32
    return %c0_i32, %c0_i32_0 : i32, i32
  }
  func.func @transform_4(%arg0: i32) -> (i32, i32) {
    %c0_i32 = arith.constant 0 : i32
    %c0_i32_0 = arith.constant 0 : i32
    %c0_i32_1 = arith.constant 0 : i32
    return %c0_i32, %c0_i32_0 : i32, i32
  }
  func.func @transform_5(%arg0: i32) -> (i32, i32, i32) {
    %c0_i32 = arith.constant 0 : i32
    %c0_i32_0 = arith.constant 0 : i32
    %c0_i32_1 = arith.constant 0 : i32
    return %arg0, %c0_i32, %c0_i32_0 : i32, i32, i32
  }
}

</mosaic_0001>

<llo_original>
// kernel: tpu_custom_call.1
$region0: #{tpu_custom_call.1}
  #allocation0 [shape = 'u32[]', space=smem, size = 0x4, offset = 0x4, fixed_abs, tag = 'smem constant byte address 0x4 - core index']
  #allocation1 [shape = 'u32[144,128]{1,0:T(1,128)}', space=vmem, size = 0x12000, scoped, tag = 'internal scratch']
  %s0 = inlined_call_operand.hbm [shape: f32[2,8,32], index: 0, kind: input, shape index: {}]
  %s1 = inlined_call_operand.hbm [shape: f32[32,96], index: 1, kind: input, shape index: {}]
  %s2 = inlined_call_operand.vmem [shape: f32[1,96], index: 2, kind: input, shape index: {}]
  %s3 = inlined_call_operand.hbm [shape: f32[32,32], index: 3, kind: input, shape index: {}]
  %s4 = inlined_call_operand.vmem [shape: f32[1,32], index: 4, kind: input, shape index: {}]
  %s5 = inlined_call_operand.hbm [shape: f32[2,8,32], index: 5, kind: output, shape index: {}]
  %s6 = sld [smem:[#allocation0]]
  $region65: #{tpu_custom_call.1} parent=0
    _
  %s8 = ssub.s32 1, %s6
  %s9 = scalar_select 0, %s8, %s6
  $region1: #{tpu_custom_call.1} parent=0
    #allocation2 [shape = 'u8[8192]{0}', space=vmem, size = 0x2000, scoped, tag = 'input window, operand 0']
    #allocation3 [shape = 's32[2]{0}', space=sflag, size = 0x8, scoped, tag = 'scoped memory for tpu_custom_call.1']
    #allocation4 [shape = 's32[2]{0}', space=sflag, size = 0x8, scoped, tag = 'scoped memory for tpu_custom_call.1']
    #allocation5 [shape = 'u8[16384]{0}', space=vmem, size = 0x4000, scoped, tag = 'input window, operand 1, single buffered']
    #allocation6 [shape = 's32[1]{0}', space=sflag, size = 0x4, scoped, tag = 'scoped memory for tpu_custom_call.1']
    #allocation7 [shape = 'u8[16384]{0}', space=vmem, size = 0x4000, scoped, tag = 'input window, operand 3, single buffered']
    #allocation8 [shape = 'u8[8192]{0}', space=vmem, size = 0x2000, scoped, tag = 'output window, operand 0']
    %10 = vsyncpa [#allocation3], 0
    %s11 = scalar_lea.sflag [#allocation3], 1
    %12 = vsyncpa %s11, 0
    %13 = vsyncpa [#allocation6], 0
    %14 = vsyncpa [#allocation4], 0
    %s15 = scalar_lea.sflag [#allocation4], 1
    %16 = vsyncpa %s15, 0
    loop: start=0, step=1, limit=4
    $region2: #{tpu_custom_call.1} parent=1 // loop_pre_header
      _
    $region3: #{tpu_custom_call.1} parent=1 // loop_header
      %s18 = sphi 0, %s22
      %p19 = scmp.ge.s32.totalorder %s18, 4
      %s28 = sphi 0, %s30
      %s31 = sphi 0, %s28
      %s32 = sphi 0, %s31
      %s48 = sphi 0, %s32
      %s52 = sphi 0, %s52
      %s54 = sphi 0, %s52
      %s55 = sphi 0, %s54
      %s69 = sphi 0, %s55
      %s73 = sphi 0, %s73
      %s75 = sphi 0, %s73
      %s76 = sphi 0, %s75
      %s90 = sphi 0, %s76
      %s94 = sphi 0, %s94
      %s96 = sphi 0, %s94
      %s97 = sphi 0, %s96
      %s111 = sphi 0, %s97
      %s115 = sphi 0, %s115
      %s117 = sphi 0, %s115
      %s118 = sphi 0, %s117
      %s132 = sphi 0, %s118
      %s138 = sphi 0, %s140
      %s141 = sphi 0, %s138
      %s142 = sphi 0, %s141
      %s158 = sphi 0, %s142
    $region4: #{tpu_custom_call.1} parent=1 // loop_header_branch
      %21 = sbr.rel (%p19) target = $region8
    $region5: #{tpu_custom_call.1} parent=1 // loop_body
      %s23 = ssub.s32 %s18, 1
      %s24 = ssub.s32 %s18, 2
      %s25 = sadd.s32 %s18, 1
      %s26 = ssub.s32 %s18, %s25
      %p27 = scmp.eq.s32.totalorder %s26, 0
      %s29 = sadd.s32 %s28, 1
      %s30 = scalar_select %p27, %s28, %s29
      %p33 = pneg %p27
      %p34 = scmp.eq.s32.totalorder %s18, 1
      %p35 = por %p33, %p34
      %p36 = scmp.ne.s32.totalorder %s28, %s31
      %p37 = scmp.eq.s32.totalorder %s18, 0
      %p38 = por %p36, %p37
      %p39 = scmp.ne.s32.totalorder %s28, %s31
      %p40 = scmp.eq.s32.totalorder %s23, 1
      %p41 = por %p39, %p40
      %p42 = scmp.ne.s32.totalorder %s31, %s32
      %p43 = scmp.eq.s32.totalorder %s23, 0
      %p44 = por %p42, %p43
      %p45 = scmp.ne.s32.totalorder %s31, %s32
      %p46 = scmp.eq.s32.totalorder %s24, 1
      %p47 = por %p45, %p46
      %p49 = scmp.ne.s32.totalorder %s32, %s48
      %p50 = scmp.eq.s32.totalorder %s24, 0
      %p51 = por %p49, %p50
      %s53 = sadd.s32 %s52, 1
      %p56 = scmp.eq.s32.totalorder %s18, 1
      %p57 = scmp.ne.s32.totalorder %s52, %s54
      %p58 = scmp.eq.s32.totalorder %s18, 0
      %p59 = por %p57, %p58
      %p60 = scmp.ne.s32.totalorder %s52, %s54
      %p61 = scmp.eq.s32.totalorder %s23, 1
      %p62 = por %p60, %p61
      %p63 = scmp.ne.s32.totalorder %s54, %s55
      %p64 = scmp.eq.s32.totalorder %s23, 0
      %p65 = por %p63, %p64
      %p66 = scmp.ne.s32.totalorder %s54, %s55
      %p67 = scmp.eq.s32.totalorder %s24, 1
      %p68 = por %p66, %p67
      %p70 = scmp.ne.s32.totalorder %s55, %s69
      %p71 = scmp.eq.s32.totalorder %s24, 0
      %p72 = por %p70, %p71
      %s74 = sadd.s32 %s73, 1
      %p77 = scmp.eq.s32.totalorder %s18, 1
      %p78 = scmp.ne.s32.totalorder %s73, %s75
      %p79 = scmp.eq.s32.totalorder %s18, 0
      %p80 = por %p78, %p79
      %p81 = scmp.ne.s32.totalorder %s73, %s75
      %p82 = scmp.eq.s32.totalorder %s23, 1
      %p83 = por %p81, %p82
      %p84 = scmp.ne.s32.totalorder %s75, %s76
      %p85 = scmp.eq.s32.totalorder %s23, 0
      %p86 = por %p84, %p85
      %p87 = scmp.ne.s32.totalorder %s75, %s76
      %p88 = scmp.eq.s32.totalorder %s24, 1
      %p89 = por %p87, %p88
      %p91 = scmp.ne.s32.totalorder %s76, %s90
      %p92 = scmp.eq.s32.totalorder %s24, 0
      %p93 = por %p91, %p92
      %s95 = sadd.s32 %s94, 1
      %p98 = scmp.eq.s32.totalorder %s18, 1
      %p99 = scmp.ne.s32.totalorder %s94, %s96
      %p100 = scmp.eq.s32.totalorder %s18, 0
      %p101 = por %p99, %p100
      %p102 = scmp.ne.s32.totalorder %s94, %s96
      %p103 = scmp.eq.s32.totalorder %s23, 1
      %p104 = por %p102, %p103
      %p105 = scmp.ne.s32.totalorder %s96, %s97
      %p106 = scmp.eq.s32.totalorder %s23, 0
      %p107 = por %p105, %p106
      %p108 = scmp.ne.s32.totalorder %s96, %s97
      %p109 = scmp.eq.s32.totalorder %s24, 1
      %p110 = por %p108, %p109
      %p112 = scmp.ne.s32.totalorder %s97, %s111
      %p113 = scmp.eq.s32.totalorder %s24, 0
      %p114 = por %p112, %p113
      %s116 = sadd.s32 %s115, 1
      %p119 = scmp.eq.s32.totalorder %s18, 1
      %p120 = scmp.ne.s32.totalorder %s115, %s117
      %p121 = scmp.eq.s32.totalorder %s18, 0
      %p122 = por %p120, %p121
      %p123 = scmp.ne.s32.totalorder %s115, %s117
      %p124 = scmp.eq.s32.totalorder %s23, 1
      %p125 = por %p123, %p124
      %p126 = scmp.ne.s32.totalorder %s117, %s118
      %p127 = scmp.eq.s32.totalorder %s23, 0
      %p128 = por %p126, %p127
      %p129 = scmp.ne.s32.totalorder %s117, %s118
      %p130 = scmp.eq.s32.totalorder %s24, 1
      %p131 = por %p129, %p130
      %p133 = scmp.ne.s32.totalorder %s118, %s132
      %p134 = scmp.eq.s32.totalorder %s24, 0
      %p135 = por %p133, %p134
      %s136 = ssub.s32 %s18, %s25
      %p137 = scmp.eq.s32.totalorder %s136, 0
      %s139 = sadd.s32 %s138, 1
      %s140 = scalar_select %p137, %s138, %s139
      %p143 = pneg %p137
      %p144 = scmp.eq.s32.totalorder %s18, 1
      %p145 = por %p143, %p144
      %p146 = scmp.ne.s32.totalorder %s138, %s141
      %p147 = scmp.eq.s32.totalorder %s18, 0
      %p148 = por %p146, %p147
      %p149 = scmp.ne.s32.totalorder %s138, %s141
      %p150 = scmp.eq.s32.totalorder %s23, 1
      %p151 = por %p149, %p150
      %p152 = scmp.ne.s32.totalorder %s141, %s142
      %p153 = scmp.eq.s32.totalorder %s23, 0
      %p154 = por %p152, %p153
      %p155 = scmp.ne.s32.totalorder %s141, %s142
      %p156 = scmp.eq.s32.totalorder %s24, 1
      %p157 = por %p155, %p156
      %p159 = scmp.ne.s32.totalorder %s142, %s158
      %p160 = scmp.eq.s32.totalorder %s24, 0
      %p161 = por %p159, %p160
      %p162 = scmp.le.s32.totalorder 1, %s18
      %p163 = scmp.lt.s32.totalorder %s18, 3
      %p164 = pnand %p162, %p163
      %p165 = pneg %p164
      // Predicated region
      $region9: #{tpu_custom_call.1} parent=5 // pred_check
        _
      $region10: #{tpu_custom_call.1} parent=5 // pred_check_branch
        %167 = sbr.rel (%p164) target = $region12
      $region11: #{tpu_custom_call.1} parent=5 // pred_region
        %s168 = ssub.s32 %s18, 1
        // Predicated region
        $region13: #{tpu_custom_call.1} parent=11 // pred_check
          %p169 = pneg %p65
        $region14: #{tpu_custom_call.1} parent=11 // pred_check_branch
          %171 = sbr.rel (%p169) target = $region16
        $region15: #{tpu_custom_call.1} parent=11 // pred_region
          %s173 = ssub.s32 512, 512
          %174 = vsyncadd [#allocation6], %s173
          %s175 = sshll.u32 [#allocation5], 4
          %s176 = int_to_ptr.vmem [resolvable:$true] %s175
          %181 = dma.hbm_to_vmem [thread:$0]  %s1, 512, %s176, [#allocation6], 128, 128, 8
        $region16: #{tpu_custom_call.1} parent=11 // pred_fallthru
          _
        // Predicated region
        $region17: #{tpu_custom_call.1} parent=11 // pred_check
          %p182 = pneg %p86
        $region18: #{tpu_custom_call.1} parent=11 // pred_check_branch
          %184 = sbr.rel (%p182) target = $region20
        $region19: #{tpu_custom_call.1} parent=11 // pred_region
          _
        $region20: #{tpu_custom_call.1} parent=11 // pred_fallthru
          _
        // Predicated region
        $region21: #{tpu_custom_call.1} parent=11 // pred_check
          %p185 = pneg %p107
        $region22: #{tpu_custom_call.1} parent=11 // pred_check_branch
          %187 = sbr.rel (%p185) target = $region24
        $region23: #{tpu_custom_call.1} parent=11 // pred_region
          %s189 = ssub.s32 512, 512
          %190 = vsyncadd [#allocation6], %s189
          %s191 = sshll.u32 [#allocation7], 4
          %s192 = int_to_ptr.vmem [resolvable:$true] %s191
          %197 = dma.hbm_to_vmem [thread:$0]  %s3, 512, %s192, [#allocation6], 128, 128, 8
        $region24: #{tpu_custom_call.1} parent=11 // pred_fallthru
          _
        // Predicated region
        $region25: #{tpu_custom_call.1} parent=11 // pred_check
          %p198 = pneg %p128
        $region26: #{tpu_custom_call.1} parent=11 // pred_check_branch
          %200 = sbr.rel (%p198) target = $region28
        $region27: #{tpu_custom_call.1} parent=11 // pred_region
          _
        $region28: #{tpu_custom_call.1} parent=11 // pred_fallthru
          _
      $region12: #{tpu_custom_call.1} parent=5 // pred_fallthru
        _
      %p201 = scmp.lt.s32.totalorder %s18, 2
      // Predicated region
      $region29: #{tpu_custom_call.1} parent=5 // pred_check
        %p202 = pneg %p201
      $region30: #{tpu_custom_call.1} parent=5 // pred_check_branch
        %204 = sbr.rel (%p202) target = $region32
      $region31: #{tpu_custom_call.1} parent=5 // pred_region
        // Predicated region
        $region33: #{tpu_custom_call.1} parent=31 // pred_check
          %p205 = pneg %p38
        $region34: #{tpu_custom_call.1} parent=31 // pred_check_branch
          %207 = sbr.rel (%p205) target = $region36
        $region35: #{tpu_custom_call.1} parent=31 // pred_region
          %s208 = sand.u32 %s28, 1
          %s209 = scalar_lea.sflag [#allocation3], %s208
          %s210 = sand.u32 %s28, 1
          %s211 = smul.addr %s210, 8
          %s212 = scalar_lea.vmem [#allocation2], %s211
          %s214 = ssub.s32 128, 128
          %215 = vsyncadd %s209, %s214
          %s216 = smul.addr %s18, 128
          %s217 = scalar_lea.hbm %s0, %s216
          %s219 = sshll.u32 %s212, 4
          %s220 = int_to_ptr.vmem [resolvable:$true] %s219
          %222 = dma.hbm_to_vmem [thread:$0]  %s217, 128, %s220, %s209
        $region36: #{tpu_custom_call.1} parent=31 // pred_fallthru
          _
      $region32: #{tpu_custom_call.1} parent=5 // pred_fallthru
        _
      %p223 = scmp.le.s32.totalorder 1, %s18
      %p224 = scmp.lt.s32.totalorder %s18, 3
      %p225 = pnand %p223, %p224
      %p226 = pneg %p225
      // Predicated region
      $region37: #{tpu_custom_call.1} parent=5 // pred_check
        _
      $region38: #{tpu_custom_call.1} parent=5 // pred_check_branch
        %228 = sbr.rel (%p225) target = $region40
      $region39: #{tpu_custom_call.1} parent=5 // pred_region
        %s229 = ssub.s32 %s18, 1
        %s230 = sand.u32 %s31, 1
        %s231 = scalar_lea.sflag [#allocation3], %s230
        %s232 = sand.u32 %s31, 1
        %s233 = smul.addr %s232, 8
        %s234 = scalar_lea.vmem [#allocation2], %s233
        // Predicated region
        $region41: #{tpu_custom_call.1} parent=39 // pred_check
          %p235 = pneg %p44
        $region42: #{tpu_custom_call.1} parent=39 // pred_check_branch
          %237 = sbr.rel (%p235) target = $region44
        $region43: #{tpu_custom_call.1} parent=39 // pred_region
          %238 = dma.done %s231, 128
        $region44: #{tpu_custom_call.1} parent=39 // pred_fallthru
          _
        // Predicated region
        $region45: #{tpu_custom_call.1} parent=39 // pred_check
          %p239 = pneg %p65
        $region46: #{tpu_custom_call.1} parent=39 // pred_check_branch
          %241 = sbr.rel (%p239) target = $region48
        $region47: #{tpu_custom_call.1} parent=39 // pred_region
          %242 = dma.done [#allocation6], 512
        $region48: #{tpu_custom_call.1} parent=39 // pred_fallthru
          _
        // Predicated region
        $region49: #{tpu_custom_call.1} parent=39 // pred_check
          %p243 = pneg %p107
        $region50: #{tpu_custom_call.1} parent=39 // pred_check_branch
          %245 = sbr.rel (%p243) target = $region52
        $region51: #{tpu_custom_call.1} parent=39 // pred_region
          %246 = dma.done [#allocation6], 512
        $region52: #{tpu_custom_call.1} parent=39 // pred_fallthru
          _
        %s247 = sand.u32 %s31, 1
        %s248 = scalar_lea.sflag [#allocation3], %s247
        %s249 = sand.u32 %s31, 1
        %s250 = smul.addr %s249, 8
        %s251 = scalar_lea.vmem [#allocation2], %s250
        %p252 = pneg %p44
        %p253 = pneg %p41
        %p254 = pneg %p65
        %p255 = pneg %p62
        %p256 = pneg %p86
        %p257 = pneg %p83
        %p258 = pneg %p107
        %p259 = pneg %p104
        %p260 = pneg %p128
        %p261 = pneg %p125
        %p262 = pneg %p154
        %p263 = pneg %p151
        %s264 = sand.u32 %s141, 1
        %s265 = scalar_lea.sflag [#allocation4], %s264
        %s266 = sand.u32 %s141, 1
        %s267 = smul.addr %s266, 8
        %s268 = scalar_lea.vmem [#allocation8], %s267
        %v269 = vld [vmem:[#allocation5] sm:$0xff]
        %v270 = vld [vmem:[#allocation5 + $0x8] sm:$0xff]
        %v271 = vld [vmem:[#allocation5 + $0x10] sm:$0xff]
        %v272 = vld [vmem:[#allocation5 + $0x18] sm:$0xff]
        %v273 = vld [vmem:[%s2] sm:$0x1]
        %v274 = vld [vmem:[#allocation7] sm:$0xff]
        %v275 = vld [vmem:[#allocation7 + $0x8] sm:$0xff]
        %v276 = vld [vmem:[#allocation7 + $0x10] sm:$0xff]
        %v277 = vld [vmem:[#allocation7 + $0x18] sm:$0xff]
        %v278 = vld [vmem:[%s4] sm:$0x1]
        %v279 = vld [vmem:[%s234] sm:$0xff]
        %v281 = vlaneseq
        %v282 = vshrl.u32 %v281, 7
        %v283 = vsub.s32 0, %v282
        %v284 = vrot.slane %v273, %v283
        %vm286 = vcmask 261120
        %v288 = vsel %vm286, %v279, 0
        %290 = vmatprep.subr.mxu0 0.0
        %291 = vmatpush1.msra.mxu0 %v269
        %292 = vmatprep.subr.mxu0 0.0
        %293 = vmatpush1.msra.mxu0 %v270
        %294 = vmatprep.subr.mxu0 0.0
        %295 = vmatpush1.msra.mxu0 %v271
        %296 = vmatprep.subr.mxu0 0.0
        %297 = vmatpush1.msra.mxu0 %v272
        %298 = vmatprep.subr.mxu0 0.0
        %299 = vmatpush1.msra.mxu0 0.0
        %300 = vmatprep.subr.mxu0 0.0
        %301 = vmatpush1.msra.mxu0 0.0
        %302 = vmatprep.subr.mxu0 0.0
        %303 = vmatpush1.msra.mxu0 0.0
        %304 = vmatprep.subr.mxu0 0.0
        %305 = vmatpush1.msra.mxu0 0.0
        %306 = vmatprep.subr.mxu0 0.0
        %307 = vmatpush1.msra.mxu0 0.0
        %308 = vmatprep.subr.mxu0 0.0
        %309 = vmatpush1.msra.mxu0 0.0
        %310 = vmatprep.subr.mxu0 0.0
        %311 = vmatpush1.msra.mxu0 0.0
        %312 = vmatprep.subr.mxu0 0.0
        %313 = vmatpush1.msra.mxu0 0.0
        %314 = vmatprep.subr.mxu0 0.0
        %315 = vmatpush1.msra.mxu0 0.0
        %316 = vmatprep.subr.mxu0 0.0
        %317 = vmatpush1.msra.mxu0 0.0
        %318 = vmatprep.subr.mxu0 0.0
        %319 = vmatpush1.msra.mxu0 0.0
        %320 = vmatprep.subr.mxu0 0.0
        %321 = vmatpush1.msra.mxu0 0.0
        %322 = vmatprep.subr.mxu0 0.0
        %323 = vmatpush1.msra.mxu0 0.0
        %324 = vmatprep.subr.mxu0 0.0
        %325 = vmatpush1.msra.mxu0 0.0
        %326 = vmatprep.subr.mxu0 0.0
        %327 = vmatpush1.msra.mxu0 0.0
        %328 = vmatprep.subr.mxu0 0.0
        %329 = vmatpush1.msra.mxu0 0.0
        %330 = vmatprep.subr.mxu0 0.0
        %331 = vmatpush1.msra.mxu0 0.0
        %332 = vmatprep.subr.mxu0 0.0
        %333 = vmatpush1.msra.mxu0 0.0
        %334 = vmatprep.subr.mxu0 0.0
        %335 = vmatpush1.msra.mxu0 0.0
        %336 = vmatprep.subr.mxu0 0.0
        %337 = vmatpush1.msra.mxu0 0.0
        %338 = vmatprep.subr.mxu0 0.0
        %339 = vmatpush1.msra.mxu0 0.0
        %340 = vmatprep.subr.mxu0 0.0
        %341 = vmatpush1.msra.mxu0 0.0
        %342 = vmatprep.subr.mxu0 0.0
        %343 = vmatpush1.msra.mxu0 0.0
        %344 = vmatprep.subr.mxu0 0.0
        %345 = vmatpush1.msra.mxu0 0.0
        %346 = vmatprep.subr.mxu0 0.0
        %347 = vmatpush1.msra.mxu0 0.0
        %348 = vmatprep.subr.mxu0 0.0
        %349 = vmatpush1.msra.mxu0 0.0
        %350 = vmatprep.subr.mxu0 0.0
        %351 = vmatpush1.msra.mxu0 0.0
        %352 = vmatprep.subr.mxu0 0.0
        %353 = vmatpush1.msra.mxu0 0.0
        %354 = vmatprep.mubr.f32.mxu0 0.0
        %355 = vmatmul.mubr.f32.gmra.mrb[0].mxu0 %v288
        %v356 = vpop.f32.mrb[0].mxu0
        %v357 = vadd.f32 %v284, %v356
        %v358 = vpop.f32.mrb[0].mxu0
        %359 = vdwg.mxu0
        %v360 = vmul.f32 %v357, 0.35355338
        %362 = vrot.lane.b32.xlu0 %v357, 96
        %v363 = vpop.permute.xlu0 %362
        %vm364 = vcmask 64512
        %v366 = vsel %vm364, %v360, 0
        %v368 = vsel %vm364, %v363, 0
        %370 = vmatprep.subr.mxu0 0.0
        %371 = vmatpush1.xpose.msra.mxu0 %v368
        %372 = vmatprep.subr.mxu0 0.0
        %373 = vmatpush1.xpose.msra.mxu0 0.0
        %374 = vmatprep.subr.mxu0 0.0
        %375 = vmatpush1.xpose.msra.mxu0 0.0
        %376 = vmatprep.subr.mxu0 0.0
        %377 = vmatpush1.xpose.msra.mxu0 0.0
        %378 = vmatprep.subr.mxu0 0.0
        %379 = vmatpush1.xpose.msra.mxu0 0.0
        %380 = vmatprep.subr.mxu0 0.0
        %381 = vmatpush1.xpose.msra.mxu0 0.0
        %382 = vmatprep.subr.mxu0 0.0
        %383 = vmatpush1.xpose.msra.mxu0 0.0
        %384 = vmatprep.subr.mxu0 0.0
        %385 = vmatpush1.xpose.msra.mxu0 0.0
        %386 = vmatprep.subr.mxu0 0.0
        %387 = vmatpush1.xpose.msra.mxu0 0.0
        %388 = vmatprep.subr.mxu0 0.0
        %389 = vmatpush1.xpose.msra.mxu0 0.0
        %390 = vmatprep.subr.mxu0 0.0
        %391 = vmatpush1.xpose.msra.mxu0 0.0
        %392 = vmatprep.subr.mxu0 0.0
        %393 = vmatpush1.xpose.msra.mxu0 0.0
        %394 = vmatprep.subr.mxu0 0.0
        %395 = vmatpush1.xpose.msra.mxu0 0.0
        %396 = vmatprep.subr.mxu0 0.0
        %397 = vmatpush1.xpose.msra.mxu0 0.0
        %398 = vmatprep.subr.mxu0 0.0
        %399 = vmatpush1.xpose.msra.mxu0 0.0
        %400 = vmatprep.subr.mxu0 0.0
        %401 = vmatpush1.xpose.msra.mxu0 0.0
        %402 = vmatprep.subr.mxu0 0.0
        %403 = vmatpush1.xpose.msra.mxu0 0.0
        %404 = vmatprep.subr.mxu0 0.0
        %405 = vmatpush1.xpose.msra.mxu0 0.0
        %406 = vmatprep.subr.mxu0 0.0
        %407 = vmatpush1.xpose.msra.mxu0 0.0
        %408 = vmatprep.subr.mxu0 0.0
        %409 = vmatpush1.xpose.msra.mxu0 0.0
        %410 = vmatprep.subr.mxu0 0.0
        %411 = vmatpush1.xpose.msra.mxu0 0.0
        %412 = vmatprep.subr.mxu0 0.0
        %413 = vmatpush1.xpose.msra.mxu0 0.0
        %414 = vmatprep.subr.mxu0 0.0
        %415 = vmatpush1.xpose.msra.mxu0 0.0
        %416 = vmatprep.subr.mxu0 0.0
        %417 = vmatpush1.xpose.msra.mxu0 0.0
        %418 = vmatprep.subr.mxu0 0.0
        %419 = vmatpush1.xpose.msra.mxu0 0.0
        %420 = vmatprep.subr.mxu0 0.0
        %421 = vmatpush1.xpose.msra.mxu0 0.0
        %422 = vmatprep.subr.mxu0 0.0
        %423 = vmatpush1.xpose.msra.mxu0 0.0
        %424 = vmatprep.subr.mxu0 0.0
        %425 = vmatpush1.xpose.msra.mxu0 0.0
        %426 = vmatprep.subr.mxu0 0.0
        %427 = vmatpush1.xpose.msra.mxu0 0.0
        %428 = vmatprep.subr.mxu0 0.0
        %429 = vmatpush1.xpose.msra.mxu0 0.0
        %430 = vmatprep.subr.mxu0 0.0
        %431 = vmatpush1.xpose.msra.mxu0 0.0
        %432 = vmatprep.subr.mxu0 0.0
        %433 = vmatpush1.xpose.msra.mxu0 0.0
        %434 = vmatprep.mubr.f32.mxu0 0.0
        %435 = vmatmul.mubr.f32.gmra.mrb[0].mxu0 %v366
        %v436 = vpop.f32.mrb[0].mxu0
        %v437 = vadd.f32 0.0, %v436
        %v438 = vpop.f32.mrb[0].mxu0
        %439 = vdwg.mxu0
        %v440 = vsel %vm364, %v437, -inf
        %441 = vmax.xlane.f32.xlu0 %v440
        %v442 = vpop.xlane.xlu0 %441
        %v443 = vsub.f32 %v437, %v442
        %v444 = vmul.f32 %v443, 1.442695
        %v445 = vpow.pop %v444
        %v446 = vsel %vm364, %v445, 0.0
        %447 = vadd.xlane.f32.xlu0 %v446
        %v448 = vpop.xlane.xlu0 %447
        %v449 = vrcp.pop %v448
        %v450 = vmul.f32 %v445, %v449
        %451 = vrot.lane.b32.xlu0 %v357, 64
        %v452 = vpop.permute.xlu0 %451
        %v455 = vsel %vm364, %v450, 0
        %457 = vmatprep.subr.mxu0 0.0
        %458 = vmatpush1.msra.mxu0 %v452
        %459 = vmatprep.subr.mxu0 0.0
        %460 = vmatpush1.msra.mxu0 0.0
        %461 = vmatprep.subr.mxu0 0.0
        %462 = vmatpush1.msra.mxu0 0.0
        %463 = vmatprep.subr.mxu0 0.0
        %464 = vmatpush1.msra.mxu0 0.0
        %465 = vmatprep.subr.mxu0 0.0
        %466 = vmatpush1.msra.mxu0 0.0
        %467 = vmatprep.subr.mxu0 0.0
        %468 = vmatpush1.msra.mxu0 0.0
        %469 = vmatprep.subr.mxu0 0.0
        %470 = vmatpush1.msra.mxu0 0.0
        %471 = vmatprep.subr.mxu0 0.0
        %472 = vmatpush1.msra.mxu0 0.0
        %473 = vmatprep.subr.mxu0 0.0
        %474 = vmatpush1.msra.mxu0 0.0
        %475 = vmatprep.subr.mxu0 0.0
        %476 = vmatpush1.msra.mxu0 0.0
        %477 = vmatprep.subr.mxu0 0.0
        %478 = vmatpush1.msra.mxu0 0.0
        %479 = vmatprep.subr.mxu0 0.0
        %480 = vmatpush1.msra.mxu0 0.0
        %481 = vmatprep.subr.mxu0 0.0
        %482 = vmatpush1.msra.mxu0 0.0
        %483 = vmatprep.subr.mxu0 0.0
        %484 = vmatpush1.msra.mxu0 0.0
        %485 = vmatprep.subr.mxu0 0.0
        %486 = vmatpush1.msra.mxu0 0.0
        %487 = vmatprep.subr.mxu0 0.0
        %488 = vmatpush1.msra.mxu0 0.0
        %489 = vmatprep.subr.mxu0 0.0
        %490 = vmatpush1.msra.mxu0 0.0
        %491 = vmatprep.subr.mxu0 0.0
        %492 = vmatpush1.msra.mxu0 0.0
        %493 = vmatprep.subr.mxu0 0.0
        %494 = vmatpush1.msra.mxu0 0.0
        %495 = vmatprep.subr.mxu0 0.0
        %496 = vmatpush1.msra.mxu0 0.0
        %497 = vmatprep.subr.mxu0 0.0
        %498 = vmatpush1.msra.mxu0 0.0
        %499 = vmatprep.subr.mxu0 0.0
        %500 = vmatpush1.msra.mxu0 0.0
        %501 = vmatprep.subr.mxu0 0.0
        %502 = vmatpush1.msra.mxu0 0.0
        %503 = vmatprep.subr.mxu0 0.0
        %504 = vmatpush1.msra.mxu0 0.0
        %505 = vmatprep.subr.mxu0 0.0
        %506 = vmatpush1.msra.mxu0 0.0
        %507 = vmatprep.subr.mxu0 0.0
        %508 = vmatpush1.msra.mxu0 0.0
        %509 = vmatprep.subr.mxu0 0.0
        %510 = vmatpush1.msra.mxu0 0.0
        %511 = vmatprep.subr.mxu0 0.0
        %512 = vmatpush1.msra.mxu0 0.0
        %513 = vmatprep.subr.mxu0 0.0
        %514 = vmatpush1.msra.mxu0 0.0
        %515 = vmatprep.subr.mxu0 0.0
        %516 = vmatpush1.msra.mxu0 0.0
        %517 = vmatprep.subr.mxu0 0.0
        %518 = vmatpush1.msra.mxu0 0.0
        %519 = vmatprep.subr.mxu0 0.0
        %520 = vmatpush1.msra.mxu0 0.0
        %521 = vmatprep.mubr.f32.mxu0 0.0
        %522 = vmatmul.mubr.f32.gmra.mrb[0].mxu0 %v455
        %v523 = vpop.f32.mrb[0].mxu0
        %v524 = vadd.f32 0.0, %v523
        %v525 = vpop.f32.mrb[0].mxu0
        %526 = vdwg.mxu0
        %527 = vrot.lane.b32.xlu0 %v360, 120
        %v528 = vpop.permute.xlu0 %527
        %529 = vrot.lane.b32.xlu0 %v357, 88
        %v530 = vpop.permute.xlu0 %529
        %v531 = vsel %vm364, %v528, 0
        %v533 = vsel %vm364, %v530, 0
        %535 = vmatprep.subr.mxu0 0.0
        %536 = vmatpush1.xpose.msra.mxu0 %v533
        %537 = vmatprep.subr.mxu0 0.0
        %538 = vmatpush1.xpose.msra.mxu0 0.0
        %539 = vmatprep.subr.mxu0 0.0
        %540 = vmatpush1.xpose.msra.mxu0 0.0
        %541 = vmatprep.subr.mxu0 0.0
        %542 = vmatpush1.xpose.msra.mxu0 0.0
        %543 = vmatprep.subr.mxu0 0.0
        %544 = vmatpush1.xpose.msra.mxu0 0.0
        %545 = vmatprep.subr.mxu0 0.0
        %546 = vmatpush1.xpose.msra.mxu0 0.0
        %547 = vmatprep.subr.mxu0 0.0
        %548 = vmatpush1.xpose.msra.mxu0 0.0
        %549 = vmatprep.subr.mxu0 0.0
        %550 = vmatpush1.xpose.msra.mxu0 0.0
        %551 = vmatprep.subr.mxu0 0.0
        %552 = vmatpush1.xpose.msra.mxu0 0.0
        %553 = vmatprep.subr.mxu0 0.0
        %554 = vmatpush1.xpose.msra.mxu0 0.0
        %555 = vmatprep.subr.mxu0 0.0
        %556 = vmatpush1.xpose.msra.mxu0 0.0
        %557 = vmatprep.subr.mxu0 0.0
        %558 = vmatpush1.xpose.msra.mxu0 0.0
        %559 = vmatprep.subr.mxu0 0.0
        %560 = vmatpush1.xpose.msra.mxu0 0.0
        %561 = vmatprep.subr.mxu0 0.0
        %562 = vmatpush1.xpose.msra.mxu0 0.0
        %563 = vmatprep.subr.mxu0 0.0
        %564 = vmatpush1.xpose.msra.mxu0 0.0
        %565 = vmatprep.subr.mxu0 0.0
        %566 = vmatpush1.xpose.msra.mxu0 0.0
        %567 = vmatprep.subr.mxu0 0.0
        %568 = vmatpush1.xpose.msra.mxu0 0.0
        %569 = vmatprep.subr.mxu0 0.0
        %570 = vmatpush1.xpose.msra.mxu0 0.0
        %571 = vmatprep.subr.mxu0 0.0
        %572 = vmatpush1.xpose.msra.mxu0 0.0
        %573 = vmatprep.subr.mxu0 0.0
        %574 = vmatpush1.xpose.msra.mxu0 0.0
        %575 = vmatprep.subr.mxu0 0.0
        %576 = vmatpush1.xpose.msra.mxu0 0.0
        %577 = vmatprep.subr.mxu0 0.0
        %578 = vmatpush1.xpose.msra.mxu0 0.0
        %579 = vmatprep.subr.mxu0 0.0
        %580 = vmatpush1.xpose.msra.mxu0 0.0
        %581 = vmatprep.subr.mxu0 0.0
        %582 = vmatpush1.xpose.msra.mxu0 0.0
        %583 = vmatprep.subr.mxu0 0.0
        %584 = vmatpush1.xpose.msra.mxu0 0.0
        %585 = vmatprep.subr.mxu0 0.0
        %586 = vmatpush1.xpose.msra.mxu0 0.0
        %587 = vmatprep.subr.mxu0 0.0
        %588 = vmatpush1.xpose.msra.mxu0 0.0
        %589 = vmatprep.subr.mxu0 0.0
        %590 = vmatpush1.xpose.msra.mxu0 0.0
        %591 = vmatprep.subr.mxu0 0.0
        %592 = vmatpush1.xpose.msra.mxu0 0.0
        %593 = vmatprep.subr.mxu0 0.0
        %594 = vmatpush1.xpose.msra.mxu0 0.0
        %595 = vmatprep.subr.mxu0 0.0
        %596 = vmatpush1.xpose.msra.mxu0 0.0
        %597 = vmatprep.subr.mxu0 0.0
        %598 = vmatpush1.xpose.msra.mxu0 0.0
        %599 = vmatprep.mubr.f32.mxu0 0.0
        %600 = vmatmul.mubr.f32.gmra.mrb[0].mxu0 %v531
        %v601 = vpop.f32.mrb[0].mxu0
        %v602 = vadd.f32 0.0, %v601
        %v603 = vpop.f32.mrb[0].mxu0
        %604 = vdwg.mxu0
        %v605 = vsel %vm364, %v602, -inf
        %606 = vmax.xlane.f32.xlu0 %v605
        %v607 = vpop.xlane.xlu0 %606
        %v608 = vsub.f32 %v602, %v607
        %v609 = vmul.f32 %v608, 1.442695
        %v610 = vpow.pop %v609
        %v611 = vsel %vm364, %v610, 0.0
        %612 = vadd.xlane.f32.xlu0 %v611
        %v613 = vpop.xlane.xlu0 %612
        %v614 = vrcp.pop %v613
        %v615 = vmul.f32 %v610, %v614
        %616 = vrot.lane.b32.xlu0 %v357, 56
        %v617 = vpop.permute.xlu0 %616
        %v620 = vsel %vm364, %v615, 0
        %622 = vmatprep.subr.mxu0 0.0
        %623 = vmatpush1.msra.mxu0 %v617
        %624 = vmatprep.subr.mxu0 0.0
        %625 = vmatpush1.msra.mxu0 0.0
        %626 = vmatprep.subr.mxu0 0.0
        %627 = vmatpush1.msra.mxu0 0.0
        %628 = vmatprep.subr.mxu0 0.0
        %629 = vmatpush1.msra.mxu0 0.0
        %630 = vmatprep.subr.mxu0 0.0
        %631 = vmatpush1.msra.mxu0 0.0
        %632 = vmatprep.subr.mxu0 0.0
        %633 = vmatpush1.msra.mxu0 0.0
        %634 = vmatprep.subr.mxu0 0.0
        %635 = vmatpush1.msra.mxu0 0.0
        %636 = vmatprep.subr.mxu0 0.0
        %637 = vmatpush1.msra.mxu0 0.0
        %638 = vmatprep.subr.mxu0 0.0
        %639 = vmatpush1.msra.mxu0 0.0
        %640 = vmatprep.subr.mxu0 0.0
        %641 = vmatpush1.msra.mxu0 0.0
        %642 = vmatprep.subr.mxu0 0.0
        %643 = vmatpush1.msra.mxu0 0.0
        %644 = vmatprep.subr.mxu0 0.0
        %645 = vmatpush1.msra.mxu0 0.0
        %646 = vmatprep.subr.mxu0 0.0
        %647 = vmatpush1.msra.mxu0 0.0
        %648 = vmatprep.subr.mxu0 0.0
        %649 = vmatpush1.msra.mxu0 0.0
        %650 = vmatprep.subr.mxu0 0.0
        %651 = vmatpush1.msra.mxu0 0.0
        %652 = vmatprep.subr.mxu0 0.0
        %653 = vmatpush1.msra.mxu0 0.0
        %654 = vmatprep.subr.mxu0 0.0
        %655 = vmatpush1.msra.mxu0 0.0
        %656 = vmatprep.subr.mxu0 0.0
        %657 = vmatpush1.msra.mxu0 0.0
        %658 = vmatprep.subr.mxu0 0.0
        %659 = vmatpush1.msra.mxu0 0.0
        %660 = vmatprep.subr.mxu0 0.0
        %661 = vmatpush1.msra.mxu0 0.0
        %662 = vmatprep.subr.mxu0 0.0
        %663 = vmatpush1.msra.mxu0 0.0
        %664 = vmatprep.subr.mxu0 0.0
        %665 = vmatpush1.msra.mxu0 0.0
        %666 = vmatprep.subr.mxu0 0.0
        %667 = vmatpush1.msra.mxu0 0.0
        %668 = vmatprep.subr.mxu0 0.0
        %669 = vmatpush1.msra.mxu0 0.0
        %670 = vmatprep.subr.mxu0 0.0
        %671 = vmatpush1.msra.mxu0 0.0
        %672 = vmatprep.subr.mxu0 0.0
        %673 = vmatpush1.msra.mxu0 0.0
        %674 = vmatprep.subr.mxu0 0.0
        %675 = vmatpush1.msra.mxu0 0.0
        %676 = vmatprep.subr.mxu0 0.0
        %677 = vmatpush1.msra.mxu0 0.0
        %678 = vmatprep.subr.mxu0 0.0
        %679 = vmatpush1.msra.mxu0 0.0
        %680 = vmatprep.subr.mxu0 0.0
        %681 = vmatpush1.msra.mxu0 0.0
        %682 = vmatprep.subr.mxu0 0.0
        %683 = vmatpush1.msra.mxu0 0.0
        %684 = vmatprep.subr.mxu0 0.0
        %685 = vmatpush1.msra.mxu0 0.0
        %686 = vmatprep.mubr.f32.mxu0 0.0
        %687 = vmatmul.mubr.f32.gmra.mrb[0].mxu0 %v620
        %v688 = vpop.f32.mrb[0].mxu0
        %v689 = vadd.f32 0.0, %v688
        %v690 = vpop.f32.mrb[0].mxu0
        %691 = vdwg.mxu0
        %692 = vrot.lane.b32.xlu0 %v360, 112
        %v693 = vpop.permute.xlu0 %692
        %694 = vrot.lane.b32.xlu0 %v357, 80
        %v695 = vpop.permute.xlu0 %694
        %v696 = vsel %vm364, %v693, 0
        %v698 = vsel %vm364, %v695, 0
        %700 = vmatprep.subr.mxu0 0.0
        %701 = vmatpush1.xpose.msra.mxu0 %v698
        %702 = vmatprep.subr.mxu0 0.0
        %703 = vmatpush1.xpose.msra.mxu0 0.0
        %704 = vmatprep.subr.mxu0 0.0
        %705 = vmatpush1.xpose.msra.mxu0 0.0
        %706 = vmatprep.subr.mxu0 0.0
        %707 = vmatpush1.xpose.msra.mxu0 0.0
        %708 = vmatprep.subr.mxu0 0.0
        %709 = vmatpush1.xpose.msra.mxu0 0.0
        %710 = vmatprep.subr.mxu0 0.0
        %711 = vmatpush1.xpose.msra.mxu0 0.0
        %712 = vmatprep.subr.mxu0 0.0
        %713 = vmatpush1.xpose.msra.mxu0 0.0
        %714 = vmatprep.subr.mxu0 0.0
        %715 = vmatpush1.xpose.msra.mxu0 0.0
        %716 = vmatprep.subr.mxu0 0.0
        %717 = vmatpush1.xpose.msra.mxu0 0.0
        %718 = vmatprep.subr.mxu0 0.0
        %719 = vmatpush1.xpose.msra.mxu0 0.0
        %720 = vmatprep.subr.mxu0 0.0
        %721 = vmatpush1.xpose.msra.mxu0 0.0
        %722 = vmatprep.subr.mxu0 0.0
        %723 = vmatpush1.xpose.msra.mxu0 0.0
        %724 = vmatprep.subr.mxu0 0.0
        %725 = vmatpush1.xpose.msra.mxu0 0.0
        %726 = vmatprep.subr.mxu0 0.0
        %727 = vmatpush1.xpose.msra.mxu0 0.0
        %728 = vmatprep.subr.mxu0 0.0
        %729 = vmatpush1.xpose.msra.mxu0 0.0
        %730 = vmatprep.subr.mxu0 0.0
        %731 = vmatpush1.xpose.msra.mxu0 0.0
        %732 = vmatprep.subr.mxu0 0.0
        %733 = vmatpush1.xpose.msra.mxu0 0.0
        %734 = vmatprep.subr.mxu0 0.0
        %735 = vmatpush1.xpose.msra.mxu0 0.0
        %736 = vmatprep.subr.mxu0 0.0
        %737 = vmatpush1.xpose.msra.mxu0 0.0
        %738 = vmatprep.subr.mxu0 0.0
        %739 = vmatpush1.xpose.msra.mxu0 0.0
        %740 = vmatprep.subr.mxu0 0.0
        %741 = vmatpush1.xpose.msra.mxu0 0.0
        %742 = vmatprep.subr.mxu0 0.0
        %743 = vmatpush1.xpose.msra.mxu0 0.0
        %744 = vmatprep.subr.mxu0 0.0
        %745 = vmatpush1.xpose.msra.mxu0 0.0
        %746 = vmatprep.subr.mxu0 0.0
        %747 = vmatpush1.xpose.msra.mxu0 0.0
        %748 = vmatprep.subr.mxu0 0.0
        %749 = vmatpush1.xpose.msra.mxu0 0.0
        %750 = vmatprep.subr.mxu0 0.0
        %751 = vmatpush1.xpose.msra.mxu0 0.0
        %752 = vmatprep.subr.mxu0 0.0
        %753 = vmatpush1.xpose.msra.mxu0 0.0
        %754 = vmatprep.subr.mxu0 0.0
        %755 = vmatpush1.xpose.msra.mxu0 0.0
        %756 = vmatprep.subr.mxu0 0.0
        %757 = vmatpush1.xpose.msra.mxu0 0.0
        %758 = vmatprep.subr.mxu0 0.0
        %759 = vmatpush1.xpose.msra.mxu0 0.0
        %760 = vmatprep.subr.mxu0 0.0
        %761 = vmatpush1.xpose.msra.mxu0 0.0
        %762 = vmatprep.subr.mxu0 0.0
        %763 = vmatpush1.xpose.msra.mxu0 0.0
        %764 = vmatprep.mubr.f32.mxu0 0.0
        %765 = vmatmul.mubr.f32.gmra.mrb[0].mxu0 %v696
        %v766 = vpop.f32.mrb[0].mxu0
        %v767 = vadd.f32 0.0, %v766
        %v768 = vpop.f32.mrb[0].mxu0
        %769 = vdwg.mxu0
        %v770 = vsel %vm364, %v767, -inf
        %771 = vmax.xlane.f32.xlu0 %v770
        %v772 = vpop.xlane.xlu0 %771
        %v773 = vsub.f32 %v767, %v772
        %v774 = vmul.f32 %v773, 1.442695
        %v775 = vpow.pop %v774
        %v776 = vsel %vm364, %v775, 0.0
        %777 = vadd.xlane.f32.xlu0 %v776
        %v778 = vpop.xlane.xlu0 %777
        %v779 = vrcp.pop %v778
        %v780 = vmul.f32 %v775, %v779
        %781 = vrot.lane.b32.xlu0 %v357, 48
        %v782 = vpop.permute.xlu0 %781
        %v785 = vsel %vm364, %v780, 0
        %787 = vmatprep.subr.mxu0 0.0
        %788 = vmatpush1.msra.mxu0 %v782
        %789 = vmatprep.subr.mxu0 0.0
        %790 = vmatpush1.msra.mxu0 0.0
        %791 = vmatprep.subr.mxu0 0.0
        %792 = vmatpush1.msra.mxu0 0.0
        %793 = vmatprep.subr.mxu0 0.0
        %794 = vmatpush1.msra.mxu0 0.0
        %795 = vmatprep.subr.mxu0 0.0
        %796 = vmatpush1.msra.mxu0 0.0
        %797 = vmatprep.subr.mxu0 0.0
        %798 = vmatpush1.msra.mxu0 0.0
        %799 = vmatprep.subr.mxu0 0.0
        %800 = vmatpush1.msra.mxu0 0.0
        %801 = vmatprep.subr.mxu0 0.0
        %802 = vmatpush1.msra.mxu0 0.0
        %803 = vmatprep.subr.mxu0 0.0
        %804 = vmatpush1.msra.mxu0 0.0
        %805 = vmatprep.subr.mxu0 0.0
        %806 = vmatpush1.msra.mxu0 0.0
        %807 = vmatprep.subr.mxu0 0.0
        %808 = vmatpush1.msra.mxu0 0.0
        %809 = vmatprep.subr.mxu0 0.0
        %810 = vmatpush1.msra.mxu0 0.0
        %811 = vmatprep.subr.mxu0 0.0
        %812 = vmatpush1.msra.mxu0 0.0
        %813 = vmatprep.subr.mxu0 0.0
        %814 = vmatpush1.msra.mxu0 0.0
        %815 = vmatprep.subr.mxu0 0.0
        %816 = vmatpush1.msra.mxu0 0.0
        %817 = vmatprep.subr.mxu0 0.0
        %818 = vmatpush1.msra.mxu0 0.0
        %819 = vmatprep.subr.mxu0 0.0
        %820 = vmatpush1.msra.mxu0 0.0
        %821 = vmatprep.subr.mxu0 0.0
        %822 = vmatpush1.msra.mxu0 0.0
        %823 = vmatprep.subr.mxu0 0.0
        %824 = vmatpush1.msra.mxu0 0.0
        %825 = vmatprep.subr.mxu0 0.0
        %826 = vmatpush1.msra.mxu0 0.0
        %827 = vmatprep.subr.mxu0 0.0
        %828 = vmatpush1.msra.mxu0 0.0
        %829 = vmatprep.subr.mxu0 0.0
        %830 = vmatpush1.msra.mxu0 0.0
        %831 = vmatprep.subr.mxu0 0.0
        %832 = vmatpush1.msra.mxu0 0.0
        %833 = vmatprep.subr.mxu0 0.0
        %834 = vmatpush1.msra.mxu0 0.0
        %835 = vmatprep.subr.mxu0 0.0
        %836 = vmatpush1.msra.mxu0 0.0
        %837 = vmatprep.subr.mxu0 0.0
        %838 = vmatpush1.msra.mxu0 0.0
        %839 = vmatprep.subr.mxu0 0.0
        %840 = vmatpush1.msra.mxu0 0.0
        %841 = vmatprep.subr.mxu0 0.0
        %842 = vmatpush1.msra.mxu0 0.0
        %843 = vmatprep.subr.mxu0 0.0
        %844 = vmatpush1.msra.mxu0 0.0
        %845 = vmatprep.subr.mxu0 0.0
        %846 = vmatpush1.msra.mxu0 0.0
        %847 = vmatprep.subr.mxu0 0.0
        %848 = vmatpush1.msra.mxu0 0.0
        %849 = vmatprep.subr.mxu0 0.0
        %850 = vmatpush1.msra.mxu0 0.0
        %851 = vmatprep.mubr.f32.mxu0 0.0
        %852 = vmatmul.mubr.f32.gmra.mrb[0].mxu0 %v785
        %v853 = vpop.f32.mrb[0].mxu0
        %v854 = vadd.f32 0.0, %v853
        %v855 = vpop.f32.mrb[0].mxu0
        %856 = vdwg.mxu0
        %857 = vrot.lane.b32.xlu0 %v360, 104
        %v858 = vpop.permute.xlu0 %857
        %859 = vrot.lane.b32.xlu0 %v357, 72
        %v860 = vpop.permute.xlu0 %859
        %v861 = vsel %vm364, %v858, 0
        %v863 = vsel %vm364, %v860, 0
        %865 = vmatprep.subr.mxu0 0.0
        %866 = vmatpush1.xpose.msra.mxu0 %v863
        %867 = vmatprep.subr.mxu0 0.0
        %868 = vmatpush1.xpose.msra.mxu0 0.0
        %869 = vmatprep.subr.mxu0 0.0
        %870 = vmatpush1.xpose.msra.mxu0 0.0
        %871 = vmatprep.subr.mxu0 0.0
        %872 = vmatpush1.xpose.msra.mxu0 0.0
        %873 = vmatprep.subr.mxu0 0.0
        %874 = vmatpush1.xpose.msra.mxu0 0.0
        %875 = vmatprep.subr.mxu0 0.0
        %876 = vmatpush1.xpose.msra.mxu0 0.0
        %877 = vmatprep.subr.mxu0 0.0
        %878 = vmatpush1.xpose.msra.mxu0 0.0
        %879 = vmatprep.subr.mxu0 0.0
        %880 = vmatpush1.xpose.msra.mxu0 0.0
        %881 = vmatprep.subr.mxu0 0.0
        %882 = vmatpush1.xpose.msra.mxu0 0.0
        %883 = vmatprep.subr.mxu0 0.0
        %884 = vmatpush1.xpose.msra.mxu0 0.0
        %885 = vmatprep.subr.mxu0 0.0
        %886 = vmatpush1.xpose.msra.mxu0 0.0
        %887 = vmatprep.subr.mxu0 0.0
        %888 = vmatpush1.xpose.msra.mxu0 0.0
        %889 = vmatprep.subr.mxu0 0.0
        %890 = vmatpush1.xpose.msra.mxu0 0.0
        %891 = vmatprep.subr.mxu0 0.0
        %892 = vmatpush1.xpose.msra.mxu0 0.0
        %893 = vmatprep.subr.mxu0 0.0
        %894 = vmatpush1.xpose.msra.mxu0 0.0
        %895 = vmatprep.subr.mxu0 0.0
        %896 = vmatpush1.xpose.msra.mxu0 0.0
        %897 = vmatprep.subr.mxu0 0.0
        %898 = vmatpush1.xpose.msra.mxu0 0.0
        %899 = vmatprep.subr.mxu0 0.0
        %900 = vmatpush1.xpose.msra.mxu0 0.0
        %901 = vmatprep.subr.mxu0 0.0
        %902 = vmatpush1.xpose.msra.mxu0 0.0
        %903 = vmatprep.subr.mxu0 0.0
        %904 = vmatpush1.xpose.msra.mxu0 0.0
        %905 = vmatprep.subr.mxu0 0.0
        %906 = vmatpush1.xpose.msra.mxu0 0.0
        %907 = vmatprep.subr.mxu0 0.0
        %908 = vmatpush1.xpose.msra.mxu0 0.0
        %909 = vmatprep.subr.mxu0 0.0
        %910 = vmatpush1.xpose.msra.mxu0 0.0
        %911 = vmatprep.subr.mxu0 0.0
        %912 = vmatpush1.xpose.msra.mxu0 0.0
        %913 = vmatprep.subr.mxu0 0.0
        %914 = vmatpush1.xpose.msra.mxu0 0.0
        %915 = vmatprep.subr.mxu0 0.0
        %916 = vmatpush1.xpose.msra.mxu0 0.0
        %917 = vmatprep.subr.mxu0 0.0
        %918 = vmatpush1.xpose.msra.mxu0 0.0
        %919 = vmatprep.subr.mxu0 0.0
        %920 = vmatpush1.xpose.msra.mxu0 0.0
        %921 = vmatprep.subr.mxu0 0.0
        %922 = vmatpush1.xpose.msra.mxu0 0.0
        %923 = vmatprep.subr.mxu0 0.0
        %924 = vmatpush1.xpose.msra.mxu0 0.0
        %925 = vmatprep.subr.mxu0 0.0
        %926 = vmatpush1.xpose.msra.mxu0 0.0
        %927 = vmatprep.subr.mxu0 0.0
        %928 = vmatpush1.xpose.msra.mxu0 0.0
        %929 = vmatprep.mubr.f32.mxu0 0.0
        %930 = vmatmul.mubr.f32.gmra.mrb[0].mxu0 %v861
        %v931 = vpop.f32.mrb[0].mxu0
        %v932 = vadd.f32 0.0, %v931
        %v933 = vpop.f32.mrb[0].mxu0
        %934 = vdwg.mxu0
        %v935 = vsel %vm364, %v932, -inf
        %936 = vmax.xlane.f32.xlu0 %v935
        %v937 = vpop.xlane.xlu0 %936
        %v938 = vsub.f32 %v932, %v937
        %v939 = vmul.f32 %v938, 1.442695
        %v940 = vpow.pop %v939
        %v941 = vsel %vm364, %v940, 0.0
        %942 = vadd.xlane.f32.xlu0 %v941
        %v943 = vpop.xlane.xlu0 %942
        %v944 = vrcp.pop %v943
        %v945 = vmul.f32 %v940, %v944
        %946 = vrot.lane.b32.xlu0 %v357, 40
        %v947 = vpop.permute.xlu0 %946
        %v950 = vsel %vm364, %v945, 0
        %952 = vmatprep.subr.mxu0 0.0
        %953 = vmatpush1.msra.mxu0 %v947
        %954 = vmatprep.subr.mxu0 0.0
        %955 = vmatpush1.msra.mxu0 0.0
        %956 = vmatprep.subr.mxu0 0.0
        %957 = vmatpush1.msra.mxu0 0.0
        %958 = vmatprep.subr.mxu0 0.0
        %959 = vmatpush1.msra.mxu0 0.0
        %960 = vmatprep.subr.mxu0 0.0
        %961 = vmatpush1.msra.mxu0 0.0
        %962 = vmatprep.subr.mxu0 0.0
        %963 = vmatpush1.msra.mxu0 0.0
        %964 = vmatprep.subr.mxu0 0.0
        %965 = vmatpush1.msra.mxu0 0.0
        %966 = vmatprep.subr.mxu0 0.0
        %967 = vmatpush1.msra.mxu0 0.0
        %968 = vmatprep.subr.mxu0 0.0
        %969 = vmatpush1.msra.mxu0 0.0
        %970 = vmatprep.subr.mxu0 0.0
        %971 = vmatpush1.msra.mxu0 0.0
        %972 = vmatprep.subr.mxu0 0.0
        %973 = vmatpush1.msra.mxu0 0.0
        %974 = vmatprep.subr.mxu0 0.0
        %975 = vmatpush1.msra.mxu0 0.0
        %976 = vmatprep.subr.mxu0 0.0
        %977 = vmatpush1.msra.mxu0 0.0
        %978 = vmatprep.subr.mxu0 0.0
        %979 = vmatpush1.msra.mxu0 0.0
        %980 = vmatprep.subr.mxu0 0.0
        %981 = vmatpush1.msra.mxu0 0.0
        %982 = vmatprep.subr.mxu0 0.0
        %983 = vmatpush1.msra.mxu0 0.0
        %984 = vmatprep.subr.mxu0 0.0
        %985 = vmatpush1.msra.mxu0 0.0
        %986 = vmatprep.subr.mxu0 0.0
        %987 = vmatpush1.msra.mxu0 0.0
        %988 = vmatprep.subr.mxu0 0.0
        %989 = vmatpush1.msra.mxu0 0.0
        %990 = vmatprep.subr.mxu0 0.0
        %991 = vmatpush1.msra.mxu0 0.0
        %992 = vmatprep.subr.mxu0 0.0
        %993 = vmatpush1.msra.mxu0 0.0
        %994 = vmatprep.subr.mxu0 0.0
        %995 = vmatpush1.msra.mxu0 0.0
        %996 = vmatprep.subr.mxu0 0.0
        %997 = vmatpush1.msra.mxu0 0.0
        %998 = vmatprep.subr.mxu0 0.0
        %999 = vmatpush1.msra.mxu0 0.0
        %1000 = vmatprep.subr.mxu0 0.0
        %1001 = vmatpush1.msra.mxu0 0.0
        %1002 = vmatprep.subr.mxu0 0.0
        %1003 = vmatpush1.msra.mxu0 0.0
        %1004 = vmatprep.subr.mxu0 0.0
        %1005 = vmatpush1.msra.mxu0 0.0
        %1006 = vmatprep.subr.mxu0 0.0
        %1007 = vmatpush1.msra.mxu0 0.0
        %1008 = vmatprep.subr.mxu0 0.0
        %1009 = vmatpush1.msra.mxu0 0.0
        %1010 = vmatprep.subr.mxu0 0.0
        %1011 = vmatpush1.msra.mxu0 0.0
        %1012 = vmatprep.subr.mxu0 0.0
        %1013 = vmatpush1.msra.mxu0 0.0
        %1014 = vmatprep.subr.mxu0 0.0
        %1015 = vmatpush1.msra.mxu0 0.0
        %1016 = vmatprep.mubr.f32.mxu0 0.0
        %1017 = vmatmul.mubr.f32.gmra.mrb[0].mxu0 %v950
        %v1018 = vpop.f32.mrb[0].mxu0
        %v1019 = vadd.f32 0.0, %v1018
        %v1020 = vpop.f32.mrb[0].mxu0
        %1021 = vdwg.mxu0
        %1023 = vrot.lane.b32.xlu0 %v689, 8
        %v1024 = vpop.permute.xlu0 %1023
        %1027 = vrot.lane.b32.xlu0 %v854, 16
        %v1028 = vpop.permute.xlu0 %1027
        %1031 = vrot.lane.b32.xlu0 %v1019, 24
        %v1032 = vpop.permute.xlu0 %1031
        %v1034 = vsel %vm364, %v524, %v1024
        %vm1035 = vcmask 130048
        %v1036 = vsel %vm1035, %v1034, %v1028
        %vm1037 = vcmask 195584
        %v1038 = vsel %vm1037, %v1036, %v1032
        %v1040 = vlaneseq
        %v1041 = vshrl.u32 %v1040, 7
        %v1042 = vsub.s32 0, %v1041
        %v1043 = vrot.slane %v278, %v1042
        %v1046 = vsel %vm286, %v1038, 0
        %1048 = vmatprep.subr.mxu0 0.0
        %1049 = vmatpush1.msra.mxu0 %v274
        %1050 = vmatprep.subr.mxu0 0.0
        %1051 = vmatpush1.msra.mxu0 %v275
        %1052 = vmatprep.subr.mxu0 0.0
        %1053 = vmatpush1.msra.mxu0 %v276
        %1054 = vmatprep.subr.mxu0 0.0
        %1055 = vmatpush1.msra.mxu0 %v277
        %1056 = vmatprep.subr.mxu0 0.0
        %1057 = vmatpush1.msra.mxu0 0.0
        %1058 = vmatprep.subr.mxu0 0.0
        %1059 = vmatpush1.msra.mxu0 0.0
        %1060 = vmatprep.subr.mxu0 0.0
        %1061 = vmatpush1.msra.mxu0 0.0
        %1062 = vmatprep.subr.mxu0 0.0
        %1063 = vmatpush1.msra.mxu0 0.0
        %1064 = vmatprep.subr.mxu0 0.0
        %1065 = vmatpush1.msra.mxu0 0.0
        %1066 = vmatprep.subr.mxu0 0.0
        %1067 = vmatpush1.msra.mxu0 0.0
        %1068 = vmatprep.subr.mxu0 0.0
        %1069 = vmatpush1.msra.mxu0 0.0
        %1070 = vmatprep.subr.mxu0 0.0
        %1071 = vmatpush1.msra.mxu0 0.0
        %1072 = vmatprep.subr.mxu0 0.0
        %1073 = vmatpush1.msra.mxu0 0.0
        %1074 = vmatprep.subr.mxu0 0.0
        %1075 = vmatpush1.msra.mxu0 0.0
        %1076 = vmatprep.subr.mxu0 0.0
        %1077 = vmatpush1.msra.mxu0 0.0
        %1078 = vmatprep.subr.mxu0 0.0
        %1079 = vmatpush1.msra.mxu0 0.0
        %1080 = vmatprep.subr.mxu0 0.0
        %1081 = vmatpush1.msra.mxu0 0.0
        %1082 = vmatprep.subr.mxu0 0.0
        %1083 = vmatpush1.msra.mxu0 0.0
        %1084 = vmatprep.subr.mxu0 0.0
        %1085 = vmatpush1.msra.mxu0 0.0
        %1086 = vmatprep.subr.mxu0 0.0
        %1087 = vmatpush1.msra.mxu0 0.0
        %1088 = vmatprep.subr.mxu0 0.0
        %1089 = vmatpush1.msra.mxu0 0.0
        %1090 = vmatprep.subr.mxu0 0.0
        %1091 = vmatpush1.msra.mxu0 0.0
        %1092 = vmatprep.subr.mxu0 0.0
        %1093 = vmatpush1.msra.mxu0 0.0
        %1094 = vmatprep.subr.mxu0 0.0
        %1095 = vmatpush1.msra.mxu0 0.0
        %1096 = vmatprep.subr.mxu0 0.0
        %1097 = vmatpush1.msra.mxu0 0.0
        %1098 = vmatprep.subr.mxu0 0.0
        %1099 = vmatpush1.msra.mxu0 0.0
        %1100 = vmatprep.subr.mxu0 0.0
        %1101 = vmatpush1.msra.mxu0 0.0
        %1102 = vmatprep.subr.mxu0 0.0
        %1103 = vmatpush1.msra.mxu0 0.0
        %1104 = vmatprep.subr.mxu0 0.0
        %1105 = vmatpush1.msra.mxu0 0.0
        %1106 = vmatprep.subr.mxu0 0.0
        %1107 = vmatpush1.msra.mxu0 0.0
        %1108 = vmatprep.subr.mxu0 0.0
        %1109 = vmatpush1.msra.mxu0 0.0
        %1110 = vmatprep.subr.mxu0 0.0
        %1111 = vmatpush1.msra.mxu0 0.0
        %1112 = vmatprep.mubr.f32.mxu0 0.0
        %1113 = vmatmul.mubr.f32.gmra.mrb[0].mxu0 %v1046
        %v1114 = vpop.f32.mrb[0].mxu0
        %v1115 = vadd.f32 %v1043, %v1114
        %v1116 = vpop.f32.mrb[0].mxu0
        %1117 = vdwg.mxu0
        %1118 = vst.msk [vmem:[%s268] sm:$0xff] %vm286, %v1115
        %s1119 = sand.u32 %s141, 1
        %s1120 = scalar_lea.sflag [#allocation4], %s1119
        %s1121 = sand.u32 %s141, 1
        %s1122 = smul.addr %s1121, 8
        %s1123 = scalar_lea.vmem [#allocation8], %s1122
        // Predicated region
        $region53: #{tpu_custom_call.1} parent=39 // pred_check
          %p1124 = pneg %p151
        $region54: #{tpu_custom_call.1} parent=39 // pred_check_branch
          %1126 = sbr.rel (%p1124) target = $region56
        $region55: #{tpu_custom_call.1} parent=39 // pred_region
          %s1128 = ssub.s32 128, 128
          %1129 = vsyncadd %s1120, %s1128
          %s1130 = smul.addr %s23, 128
          %s1131 = scalar_lea.hbm %s5, %s1130
          %s1133 = sshll.u32 %s1123, 4
          %s1134 = int_to_ptr.vmem [resolvable:$true] %s1133
          %1136 = dma.vmem_to_hbm [thread:$0]  %s1134, 128, %s1131, %s1120
        $region56: #{tpu_custom_call.1} parent=39 // pred_fallthru
          _
      $region40: #{tpu_custom_call.1} parent=5 // pred_fallthru
        _
      %p1137 = scmp.le.s32.totalorder 2, %s18
      // Predicated region
      $region57: #{tpu_custom_call.1} parent=5 // pred_check
        %p1138 = pneg %p1137
      $region58: #{tpu_custom_call.1} parent=5 // pred_check_branch
        %1140 = sbr.rel (%p1138) target = $region60
      $region59: #{tpu_custom_call.1} parent=5 // pred_region
        %s1141 = ssub.s32 %s18, 2
        // Predicated region
        $region61: #{tpu_custom_call.1} parent=59 // pred_check
          %p1142 = pneg %p157
        $region62: #{tpu_custom_call.1} parent=59 // pred_check_branch
          %1144 = sbr.rel (%p1142) target = $region64
        $region63: #{tpu_custom_call.1} parent=59 // pred_region
          %s1145 = sand.u32 %s142, 1
          %s1146 = scalar_lea.sflag [#allocation4], %s1145
          %s1147 = sand.u32 %s142, 1
          %s1148 = smul.addr %s1147, 8
          %s1149 = scalar_lea.vmem [#allocation8], %s1148
          %1150 = dma.done %s1146, 128
        $region64: #{tpu_custom_call.1} parent=59 // pred_fallthru
          _
      $region60: #{tpu_custom_call.1} parent=5 // pred_fallthru
        _
    $region6: #{tpu_custom_call.1} parent=1 // loop_footer
      %s22 = sadd.s32 1, %s18
    $region7: #{tpu_custom_call.1} parent=1 // loop_footer_branch
      %17 = sbr.rel target = $region3
    $region8: #{tpu_custom_call.1} parent=1 // loop_exit
      _
    %1151 = vsyncpa [#allocation3], 1
    %s1152 = scalar_lea.sflag [#allocation3], 1
    %1153 = vsyncpa %s1152, 1
    %1154 = vsyncpa [#allocation6], 1
    %1155 = vsyncpa [#allocation4], 1
    %s1156 = scalar_lea.sflag [#allocation4], 1
    %1157 = vsyncpa %s1156, 1

</llo_original>
